<compile_context>
chip_gen: v7x
topology: tpu7x:2x2x1
jax: 0.10.0
libtpu: 0.0.40
codegen_flags: <defaults>
</compile_context>

<pallas_src>
import jax
import jax.numpy as jnp
from jax.experimental import pallas as pl
from jax.experimental.pallas import tpu as pltpu

INPUT_DIM = 512
H1 = 256        # fc1 output width
H2 = 64         # fc2 output width (real)
OUT = 2         # fc3 output width (real)
H2_PAD = 128    # fc2 output padded to a full lane width
OUT_PAD = 128   # fc3 output padded to a full lane width


def _mlp_kernel(x_ref, w1_ref, b1_ref, w2_ref, b2_ref, w3_ref, b3_ref, o_ref):
    # x arrives in its native (f32) dtype; cast to bf16 in-kernel (cheap VPU
    # work hidden under the DMA) so the wrapper never writes a bf16 copy to HBM.
    x = x_ref[...].astype(jnp.bfloat16)                                # [TB, 512]
    # fc1 + ReLU: MXU in bf16, f32 accumulation; bias add / ReLU in f32.
    h1 = jnp.dot(x, w1_ref[...], preferred_element_type=jnp.float32) + b1_ref[...]
    h1 = jnp.maximum(h1, 0.0).astype(jnp.bfloat16)                     # [TB, 256]
    # fc2 + ReLU: output padded 64 -> 128.
    # NOTE: fc3 correctness relies on h2[:, 64:128] being exactly zero. This
    # holds because w2t/b2r padding is zero and ReLU clamps at 0; additionally
    # w3t rows 64..127 are zero, so either guard alone would suffice. Keep both.
    h2 = jnp.dot(h1, w2_ref[...], preferred_element_type=jnp.float32) + b2_ref[...]
    h2 = jnp.maximum(h2, 0.0).astype(jnp.bfloat16)                     # [TB, 128]
    # fc3 (logits): output padded 2 -> 128, lane-dense bf16 store.
    o_ref[...] = (
        jnp.dot(h2, w3_ref[...], preferred_element_type=jnp.float32) + b3_ref[...]
    ).astype(o_ref.dtype)


def prepare_params(params, compute_dtype=jnp.bfloat16):
    """One-time prep: transpose weights to [in, out], zero-pad narrow dims to
    128 lanes, cast weights to the MXU dtype, keep biases in f32.
    Call once at model load time, NOT per forward pass."""
    (w1, b1), (w2, b2), (w3, b3) = params["fc1"], params["fc2"], params["fc3"]
    w1t = w1.T.astype(compute_dtype)                                           # [512, 256]
    w2t = jnp.zeros((H1, H2_PAD), compute_dtype).at[:, :H2].set(
        w2.T.astype(compute_dtype))                                            # [256, 128]
    w3t = jnp.zeros((H2_PAD, OUT_PAD), compute_dtype).at[:H2, :OUT].set(
        w3.T.astype(compute_dtype))                                            # [128, 128]
    b1r = b1[None, :].astype(jnp.float32)                                      # [1, 256]
    b2r = jnp.zeros((1, H2_PAD), jnp.float32).at[:, :H2].set(b2.astype(jnp.float32))
    b3r = jnp.zeros((1, OUT_PAD), jnp.float32).at[:, :OUT].set(b3.astype(jnp.float32))
    return (w1t, b1r, w2t, b2r, w3t, b3r)


def _round_up(n, m):
    return ((n + m - 1) // m) * m


def face_verification_mlp(x, prepared, *, block_batch=2048):
    """x: [B, input_dim] float. prepared: output of prepare_params(). Returns [B, 2] f32."""
    w1t, b1r, w2t, b2r, w3t, b3r = prepared
    B, D = x.shape
    assert D == w1t.shape[0], (D, w1t.shape)

    # Batch-tile choice:
    #  * small batch: round B up to 16-row alignment instead of padding to a
    #    big tile (B=8 -> one 16-row tile, not 256);
    #  * large batch: use the requested tile, but keep >= 2 grid steps so the
    #    "parallel" batch axis can shard across both v7x TensorCores.
    tb = max(16, _round_up(min(block_batch, _round_up(B, 16)), 16))
    if B > 1024 and pl.cdiv(B, tb) < 2:
        tb = _round_up(pl.cdiv(B, 2), 16)
    n_blocks = pl.cdiv(B, tb)
    # No jnp.pad: the last grid block may be ragged. Safe because each output
    # row depends only on its own input row (no cross-row reduction in-kernel)
    # and out-of-range rows are masked on writeback / never read by the caller.

    # VMEM budget from the actual tile footprint (double-buffered x/out tiles,
    # single-buffered resident weights, f32/bf16 activation headroom), 2x margin,
    # clamped to 48 MiB to leave headroom under v7x's 64 MiB VMEM.
    x_item = jnp.dtype(x.dtype).itemsize
    w_item = jnp.dtype(w1t.dtype).itemsize
    footprint = (
        2 * tb * D * x_item                                   # x tiles (double-buffered)
        + 2 * tb * OUT_PAD * 2                                # bf16 out tiles (double-buffered)
        + (w1t.size + w2t.size + w3t.size) * w_item           # weights (single-buffered)
        + (b1r.size + b2r.size + b3r.size) * 4                # biases (f32)
        + tb * (D * 2 + H1 * 4 + H1 * 2 + H2_PAD * 4 + OUT_PAD * 4)  # activations
    )
    vmem_limit = int(min(max(4 * 1024 * 1024, 2 * footprint), 48 * 1024 * 1024))

    # Weights/biases: constant block index -> DMA'd once, VMEM-resident across
    # the grid; single-buffered since the block never changes.
    const = lambda shape: pl.BlockSpec(
        shape, lambda i: (0, 0), pipeline_mode=pl.Buffered(1))

    out = pl.pallas_call(
        _mlp_kernel,
        out_shape=jax.ShapeDtypeStruct((B, OUT_PAD), jnp.bfloat16),
        grid=(n_blocks,),
        in_specs=[
            pl.BlockSpec((tb, D), lambda i: (i, 0)),   # x tiles, pipelined
            const(w1t.shape), const(b1r.shape),
            const(w2t.shape), const(b2r.shape),
            const(w3t.shape), const(b3r.shape),
        ],
        out_specs=pl.BlockSpec((tb, OUT_PAD), lambda i: (i, 0)),
        compiler_params=pltpu.CompilerParams(
            dimension_semantics=("parallel",),   # shard batch tiles across TCs on v7x
            vmem_limit_bytes=vmem_limit,
        ),
    )(x, w1t, b1r, w2t, b2r, w3t, b3r)

    return out[:, :OUT].astype(jnp.float32)


def init_params(key, input_dim=INPUT_DIM):
    """Deterministic init mirroring the nn.Linear shapes (weight: [out, in], f32)."""
    dims = [("fc1", H1, input_dim), ("fc2", H2, H1), ("fc3", OUT, H2)]
    params = {}
    for name, out_d, in_d in dims:
        key, kw, kb = jax.random.split(key, 3)
        bound = 1.0 / jnp.sqrt(in_d)  # PyTorch default uniform bound
        w = jax.random.uniform(kw, (out_d, in_d), jnp.float32, -bound, bound)
        b = jax.random.uniform(kb, (out_d,), jnp.float32, -bound, bound)
        params[name] = (w, b)
    return params


def _reference(x, params):
    (w1, b1), (w2, b2), (w3, b3) = params["fc1"], params["fc2"], params["fc3"]
    h1 = jnp.maximum(x @ w1.T + b1, 0.0)
    h2 = jnp.maximum(h1 @ w2.T + b2, 0.0)
    return h2 @ w3.T + b3


if __name__ == "__main__":
    key = jax.random.PRNGKey(0)
    key, kx = jax.random.split(key)

    B = 8
    x = jax.random.normal(kx, (B, INPUT_DIM), jnp.float32)
    params = init_params(key, INPUT_DIM)
    prepared = prepare_params(params)          # one-time transpose / pad / bf16 cast

    out = face_verification_mlp(x, prepared)
    out = jax.block_until_ready(out)

    ref = _reference(x, params)
    assert out.shape == (B, OUT), out.shape
    # bf16 matmul operands + bf16 output store with f32 accumulation -> looser
    # tolerance than pure f32.
    max_err = float(jnp.max(jnp.abs(out - ref)))
    assert jnp.allclose(out, ref, atol=5e-2, rtol=5e-2), (
        f"mismatch vs reference: max abs err = {max_err}"
    )

    print("KERNEL_OK")
</pallas_src>

<mosaic_0001>
module attributes {stable_mosaic.version = 11 : i64} {
  func.func @_mlp_kernel(%arg0: i32, %arg1: memref<16x512xf32, #tpu.memory_space<vmem>>, %arg2: memref<512x256xbf16, #tpu.memory_space<vmem>>, %arg3: memref<1x256xf32, #tpu.memory_space<vmem>>, %arg4: memref<256x128xbf16, #tpu.memory_space<vmem>>, %arg5: memref<1x128xf32, #tpu.memory_space<vmem>>, %arg6: memref<128x128xbf16, #tpu.memory_space<vmem>>, %arg7: memref<1x128xf32, #tpu.memory_space<vmem>>, %arg8: memref<16x128xbf16, #tpu.memory_space<vmem>>) attributes {dimension_semantics = [#tpu.dimension_semantics<parallel>], iteration_bounds = array<i64: 1>, scalar_prefetch = 0 : i64, scratch_operands = 0 : i64, tpu.core_type = #tpu.core_type<tc>, window_params = [{transform_indices = @transform_0, window_bounds = array<i64: 16, 512>}, {pipeline_mode = #tpu.pipeline_mode<synchronous>, transform_indices = @transform_1, window_bounds = array<i64: 512, 256>}, {pipeline_mode = #tpu.pipeline_mode<synchronous>, transform_indices = @transform_2, window_bounds = array<i64: 1, 256>}, {pipeline_mode = #tpu.pipeline_mode<synchronous>, transform_indices = @transform_3, window_bounds = array<i64: 256, 128>}, {pipeline_mode = #tpu.pipeline_mode<synchronous>, transform_indices = @transform_4, window_bounds = array<i64: 1, 128>}, {pipeline_mode = #tpu.pipeline_mode<synchronous>, transform_indices = @transform_5, window_bounds = array<i64: 128, 128>}, {pipeline_mode = #tpu.pipeline_mode<synchronous>, transform_indices = @transform_6, window_bounds = array<i64: 1, 128>}, {transform_indices = @transform_7, window_bounds = array<i64: 16, 128>}]} {
    %c0 = arith.constant 0 : index
    %c0_0 = arith.constant 0 : index
    %0 = vector.load %arg1[%c0, %c0_0] : memref<16x512xf32, #tpu.memory_space<vmem>>, vector<16x512xf32>
    %1 = arith.truncf %0 : vector<16x512xf32> to vector<16x512xbf16>
    %c0_1 = arith.constant 0 : index
    %c0_2 = arith.constant 0 : index
    %2 = vector.load %arg2[%c0_1, %c0_2] : memref<512x256xbf16, #tpu.memory_space<vmem>>, vector<512x256xbf16>
    %cst = arith.constant dense<0.000000e+00> : vector<16x256xf32>
    %3 = tpu.matmul %1, %2, %cst {dimension_numbers = #tpu.dot_dimension_numbers<[1], [0], [0], [1], [0, 0, 1, 1], [], []>} : vector<16x512xbf16>, vector<512x256xbf16>, vector<16x256xf32> -> vector<16x256xf32>
    %c0_3 = arith.constant 0 : index
    %c0_4 = arith.constant 0 : index
    %4 = vector.load %arg3[%c0_3, %c0_4] : memref<1x256xf32, #tpu.memory_space<vmem>>, vector<1x256xf32>
    %5 = vector.broadcast %4 : vector<1x256xf32> to vector<16x256xf32>
    %6 = arith.addf %3, %5 : vector<16x256xf32>
    %cst_5 = arith.constant 0.000000e+00 : f32
    %7 = vector.broadcast %cst_5 : f32 to vector<16x256xf32>
    %8 = arith.maximumf %6, %7 : vector<16x256xf32>
    %9 = arith.truncf %8 : vector<16x256xf32> to vector<16x256xbf16>
    %c0_6 = arith.constant 0 : index
    %c0_7 = arith.constant 0 : index
    %10 = vector.load %arg4[%c0_6, %c0_7] : memref<256x128xbf16, #tpu.memory_space<vmem>>, vector<256x128xbf16>
    %cst_8 = arith.constant dense<0.000000e+00> : vector<16x128xf32>
    %11 = tpu.matmul %9, %10, %cst_8 {dimension_numbers = #tpu.dot_dimension_numbers<[1], [0], [0], [1], [0, 0, 1, 1], [], []>} : vector<16x256xbf16>, vector<256x128xbf16>, vector<16x128xf32> -> vector<16x128xf32>
    %c0_9 = arith.constant 0 : index
    %c0_10 = arith.constant 0 : index
    %12 = vector.load %arg5[%c0_9, %c0_10] : memref<1x128xf32, #tpu.memory_space<vmem>>, vector<1x128xf32>
    %13 = vector.broadcast %12 : vector<1x128xf32> to vector<16x128xf32>
    %14 = arith.addf %11, %13 : vector<16x128xf32>
    %cst_11 = arith.constant 0.000000e+00 : f32
    %15 = vector.broadcast %cst_11 : f32 to vector<16x128xf32>
    %16 = arith.maximumf %14, %15 : vector<16x128xf32>
    %17 = arith.truncf %16 : vector<16x128xf32> to vector<16x128xbf16>
    %c0_12 = arith.constant 0 : index
    %c0_13 = arith.constant 0 : index
    %18 = vector.load %arg6[%c0_12, %c0_13] : memref<128x128xbf16, #tpu.memory_space<vmem>>, vector<128x128xbf16>
    %cst_14 = arith.constant dense<0.000000e+00> : vector<16x128xf32>
    %19 = tpu.matmul %17, %18, %cst_14 {dimension_numbers = #tpu.dot_dimension_numbers<[1], [0], [0], [1], [0, 0, 1, 1], [], []>} : vector<16x128xbf16>, vector<128x128xbf16>, vector<16x128xf32> -> vector<16x128xf32>
    %c0_15 = arith.constant 0 : index
    %c0_16 = arith.constant 0 : index
    %20 = vector.load %arg7[%c0_15, %c0_16] : memref<1x128xf32, #tpu.memory_space<vmem>>, vector<1x128xf32>
    %21 = vector.broadcast %20 : vector<1x128xf32> to vector<16x128xf32>
    %22 = arith.addf %19, %21 : vector<16x128xf32>
    %23 = arith.truncf %22 : vector<16x128xf32> to vector<16x128xbf16>
    %c0_17 = arith.constant 0 : index
    %c0_18 = arith.constant 0 : index
    %24 = vector.load %arg8[%c0_17, %c0_18] : memref<16x128xbf16, #tpu.memory_space<vmem>>, vector<16x128xbf16>
    tpu.vector_store %arg8[%c0_17, %c0_18], %23 {strides = array<i32>} : memref<16x128xbf16, #tpu.memory_space<vmem>>, vector<16x128xbf16>,
    return
  }
  func.func @transform_0(%arg0: i32) -> (i32, i32) {
    %c0_i32 = arith.constant 0 : i32
    %c0_i32_0 = arith.constant 0 : i32
    return %arg0, %c0_i32 : i32, i32
  }
  func.func @transform_1(%arg0: i32) -> (i32, i32) {
    %c0_i32 = arith.constant 0 : i32
    %c0_i32_0 = arith.constant 0 : i32
    %c0_i32_1 = arith.constant 0 : i32
    return %c0_i32, %c0_i32_0 : i32, i32
  }
  func.func @transform_2(%arg0: i32) -> (i32, i32) {
    %c0_i32 = arith.constant 0 : i32
    %c0_i32_0 = arith.constant 0 : i32
    %c0_i32_1 = arith.constant 0 : i32
    return %c0_i32, %c0_i32_0 : i32, i32
  }
  func.func @transform_3(%arg0: i32) -> (i32, i32) {
    %c0_i32 = arith.constant 0 : i32
    %c0_i32_0 = arith.constant 0 : i32
    %c0_i32_1 = arith.constant 0 : i32
    return %c0_i32, %c0_i32_0 : i32, i32
  }
  func.func @transform_4(%arg0: i32) -> (i32, i32) {
    %c0_i32 = arith.constant 0 : i32
    %c0_i32_0 = arith.constant 0 : i32
    %c0_i32_1 = arith.constant 0 : i32
    return %c0_i32, %c0_i32_0 : i32, i32
  }
  func.func @transform_5(%arg0: i32) -> (i32, i32) {
    %c0_i32 = arith.constant 0 : i32
    %c0_i32_0 = arith.constant 0 : i32
    %c0_i32_1 = arith.constant 0 : i32
    return %c0_i32, %c0_i32_0 : i32, i32
  }
  func.func @transform_6(%arg0: i32) -> (i32, i32) {
    %c0_i32 = arith.constant 0 : i32
    %c0_i32_0 = arith.constant 0 : i32
    %c0_i32_1 = arith.constant 0 : i32
    return %c0_i32, %c0_i32_0 : i32, i32
  }
  func.func @transform_7(%arg0: i32) -> (i32, i32) {
    %c0_i32 = arith.constant 0 : i32
    %c0_i32_0 = arith.constant 0 : i32
    return %arg0, %c0_i32 : i32, i32
  }
}

</mosaic_0001>

<llo_original>
// kernel: tpu_custom_call.1
$region0: #{tpu_custom_call.1}
  #allocation0 [shape = 'u32[]', space=smem, size = 0x4, offset = 0x4, fixed_abs, tag = 'smem constant byte address 0x4 - core index']
  #allocation1 [shape = 'u32[144,128]{1,0:T(1,128)}', space=vmem, size = 0x12000, scoped, tag = 'internal scratch']
  %s0 = inlined_call_operand.hbm [shape: f32[8,512], index: 0, kind: input, shape index: {}]
  %s1 = inlined_call_operand.hbm [shape: bf16[512,256], index: 1, kind: input, shape index: {}]
  %s2 = inlined_call_operand.vmem [shape: f32[1,256], index: 2, kind: input, shape index: {}]
  %s3 = inlined_call_operand.hbm [shape: bf16[256,128], index: 3, kind: input, shape index: {}]
  %s4 = inlined_call_operand.vmem [shape: f32[1,128], index: 4, kind: input, shape index: {}]
  %s5 = inlined_call_operand.hbm [shape: bf16[128,128], index: 5, kind: input, shape index: {}]
  %s6 = inlined_call_operand.vmem [shape: f32[1,128], index: 6, kind: input, shape index: {}]
  %s7 = inlined_call_operand.hbm [shape: bf16[8,128], index: 7, kind: output, shape index: {}]
  %s8 = sld [smem:[#allocation0]]
  $region54: #{tpu_custom_call.1} parent=0
    _
  %s10 = ssub.s32 1, %s8
  %s11 = scalar_select 0, %s10, %s8
  $region1: #{tpu_custom_call.1} parent=0
    #allocation2 [shape = 'u8[32768]{0}', space=vmem, size = 0x8000, scoped, tag = 'input window, operand 0, single buffered']
    #allocation3 [shape = 's32[1]{0}', space=sflag, size = 0x4, scoped, tag = 'scoped memory for tpu_custom_call.1']
    #allocation4 [shape = 's32[1]{0}', space=sflag, size = 0x4, scoped, tag = 'scoped memory for tpu_custom_call.1']
    #allocation5 [shape = 'u8[262144]{0}', space=vmem, size = 0x40000, scoped, tag = 'input window, operand 1, single buffered']
    #allocation6 [shape = 's32[1]{0}', space=sflag, size = 0x4, scoped, tag = 'scoped memory for tpu_custom_call.1']
    #allocation7 [shape = 'u8[65536]{0}', space=vmem, size = 0x10000, scoped, tag = 'input window, operand 3, single buffered']
    #allocation8 [shape = 'u8[32768]{0}', space=vmem, size = 0x8000, scoped, tag = 'input window, operand 5, single buffered']
    #allocation9 [shape = 's32[1]{0}', space=sflag, size = 0x4, scoped, tag = 'scoped memory for tpu_custom_call.1']
    #allocation10 [shape = 'u8[4096]{0}', space=vmem, size = 0x1000, scoped, tag = 'output window, operand 0, single buffered']
    %12 = vsyncpa [#allocation3], 0
    %13 = vsyncpa [#allocation6], 0
    %14 = vsyncpa [#allocation9], 0
    %15 = vsyncpa [#allocation4], 0
    // Predicated region
    $region2: #{tpu_custom_call.1} parent=1 // pred_check
      _
    $region3: #{tpu_custom_call.1} parent=1 // pred_check_branch
      %17 = sbr.rel (0) target = $region5
    $region4: #{tpu_custom_call.1} parent=1 // pred_region
      %s19 = ssub.s32 1024, 512
      %20 = vsyncadd [#allocation3], %s19
      %s21 = sshll.u32 [#allocation2], 4
      %s22 = int_to_ptr.vmem [resolvable:$true] %s21
      %27 = dma.hbm_to_vmem [thread:$0]  %s0, 512, %s22, [#allocation3], 512, 512, 32
    $region5: #{tpu_custom_call.1} parent=1 // pred_fallthru
      _
    // Predicated region
    $region6: #{tpu_custom_call.1} parent=1 // pred_check
      _
    $region7: #{tpu_custom_call.1} parent=1 // pred_check_branch
      %29 = sbr.rel (0) target = $region9
    $region8: #{tpu_custom_call.1} parent=1 // pred_region
      %s31 = ssub.s32 8192, 8192
      %32 = vsyncadd [#allocation6], %s31
      %s33 = sshll.u32 [#allocation5], 4
      %s34 = int_to_ptr.vmem [resolvable:$true] %s33
      %39 = dma.hbm_to_vmem [thread:$0]  %s1, 8192, %s34, [#allocation6], 128, 128, 8
    $region9: #{tpu_custom_call.1} parent=1 // pred_fallthru
      _
    // Predicated region
    $region10: #{tpu_custom_call.1} parent=1 // pred_check
      _
    $region11: #{tpu_custom_call.1} parent=1 // pred_check_branch
      %41 = sbr.rel (0) target = $region13
    $region12: #{tpu_custom_call.1} parent=1 // pred_region
      _
    $region13: #{tpu_custom_call.1} parent=1 // pred_fallthru
      _
    // Predicated region
    $region14: #{tpu_custom_call.1} parent=1 // pred_check
      _
    $region15: #{tpu_custom_call.1} parent=1 // pred_check_branch
      %43 = sbr.rel (0) target = $region17
    $region16: #{tpu_custom_call.1} parent=1 // pred_region
      %s45 = ssub.s32 2048, 2048
      %46 = vsyncadd [#allocation6], %s45
      %s47 = sshll.u32 [#allocation7], 4
      %s48 = int_to_ptr.vmem [resolvable:$true] %s47
      %53 = dma.hbm_to_vmem [thread:$0]  %s3, 2048, %s48, [#allocation6], 64, 64, 4
    $region17: #{tpu_custom_call.1} parent=1 // pred_fallthru
      _
    // Predicated region
    $region18: #{tpu_custom_call.1} parent=1 // pred_check
      _
    $region19: #{tpu_custom_call.1} parent=1 // pred_check_branch
      %55 = sbr.rel (0) target = $region21
    $region20: #{tpu_custom_call.1} parent=1 // pred_region
      _
    $region21: #{tpu_custom_call.1} parent=1 // pred_fallthru
      _
    // Predicated region
    $region22: #{tpu_custom_call.1} parent=1 // pred_check
      _
    $region23: #{tpu_custom_call.1} parent=1 // pred_check_branch
      %57 = sbr.rel (0) target = $region25
    $region24: #{tpu_custom_call.1} parent=1 // pred_region
      %s59 = ssub.s32 1024, 1024
      %60 = vsyncadd [#allocation9], %s59
      %s61 = sshll.u32 [#allocation8], 4
      %s62 = int_to_ptr.vmem [resolvable:$true] %s61
      %67 = dma.hbm_to_vmem [thread:$0]  %s5, 1024, %s62, [#allocation9], 64, 64, 4
    $region25: #{tpu_custom_call.1} parent=1 // pred_fallthru
      _
    // Predicated region
    $region26: #{tpu_custom_call.1} parent=1 // pred_check
      _
    $region27: #{tpu_custom_call.1} parent=1 // pred_check_branch
      %69 = sbr.rel (0) target = $region29
    $region28: #{tpu_custom_call.1} parent=1 // pred_region
      _
    $region29: #{tpu_custom_call.1} parent=1 // pred_fallthru
      _
    // Predicated region
    $region30: #{tpu_custom_call.1} parent=1 // pred_check
      _
    $region31: #{tpu_custom_call.1} parent=1 // pred_check_branch
      %71 = sbr.rel (0) target = $region33
    $region32: #{tpu_custom_call.1} parent=1 // pred_region
      %72 = dma.done [#allocation3], 1024
    $region33: #{tpu_custom_call.1} parent=1 // pred_fallthru
      _
    // Predicated region
    $region34: #{tpu_custom_call.1} parent=1 // pred_check
      _
    $region35: #{tpu_custom_call.1} parent=1 // pred_check_branch
      %74 = sbr.rel (0) target = $region37
    $region36: #{tpu_custom_call.1} parent=1 // pred_region
      %75 = dma.done [#allocation6], 8192
    $region37: #{tpu_custom_call.1} parent=1 // pred_fallthru
      _
    // Predicated region
    $region38: #{tpu_custom_call.1} parent=1 // pred_check
      _
    $region39: #{tpu_custom_call.1} parent=1 // pred_check_branch
      %77 = sbr.rel (0) target = $region41
    $region40: #{tpu_custom_call.1} parent=1 // pred_region
      %78 = dma.done [#allocation6], 2048
    $region41: #{tpu_custom_call.1} parent=1 // pred_fallthru
      _
    // Predicated region
    $region42: #{tpu_custom_call.1} parent=1 // pred_check
      _
    $region43: #{tpu_custom_call.1} parent=1 // pred_check_branch
      %80 = sbr.rel (0) target = $region45
    $region44: #{tpu_custom_call.1} parent=1 // pred_region
      %81 = dma.done [#allocation9], 1024
    $region45: #{tpu_custom_call.1} parent=1 // pred_fallthru
      _
    %v83 = vld [vmem:[#allocation2] sm:$0xff]
    %v84 = vld [vmem:[#allocation2 + $0x8] sm:$0xff]
    %v85 = vld [vmem:[#allocation2 + $0x10] sm:$0xff]
    %v86 = vld [vmem:[#allocation2 + $0x18] sm:$0xff]
    %v87 = vld [vmem:[#allocation2 + $0x20] sm:$0xff]
    %v88 = vld [vmem:[#allocation2 + $0x28] sm:$0xff]
    %v89 = vld [vmem:[#allocation2 + $0x30] sm:$0xff]
    %v90 = vld [vmem:[#allocation2 + $0x38] sm:$0xff]
    %v91 = vpack.c.bf16 %v87, %v83
    %v92 = vpack.c.bf16 %v88, %v84
    %v93 = vpack.c.bf16 %v89, %v85
    %v94 = vpack.c.bf16 %v90, %v86
    %v95 = vld [vmem:[#allocation5] sm:$0xff]
    %v96 = vld [vmem:[#allocation5 + $0x8] sm:$0xff]
    %v97 = vld [vmem:[#allocation5 + $0x10] sm:$0xff]
    %v98 = vld [vmem:[#allocation5 + $0x18] sm:$0xff]
    %v99 = vld [vmem:[#allocation5 + $0x20] sm:$0xff]
    %v100 = vld [vmem:[#allocation5 + $0x28] sm:$0xff]
    %v101 = vld [vmem:[#allocation5 + $0x30] sm:$0xff]
    %v102 = vld [vmem:[#allocation5 + $0x38] sm:$0xff]
    %v103 = vld [vmem:[#allocation5 + $0x40] sm:$0xff]
    %v104 = vld [vmem:[#allocation5 + $0x48] sm:$0xff]
    %v105 = vld [vmem:[#allocation5 + $0x50] sm:$0xff]
    %v106 = vld [vmem:[#allocation5 + $0x58] sm:$0xff]
    %v107 = vld [vmem:[#allocation5 + $0x60] sm:$0xff]
    %v108 = vld [vmem:[#allocation5 + $0x68] sm:$0xff]
    %v109 = vld [vmem:[#allocation5 + $0x70] sm:$0xff]
    %v110 = vld [vmem:[#allocation5 + $0x78] sm:$0xff]
    %v111 = vld [vmem:[#allocation5 + $0x80] sm:$0xff]
    %v112 = vld [vmem:[#allocation5 + $0x88] sm:$0xff]
    %v113 = vld [vmem:[#allocation5 + $0x90] sm:$0xff]
    %v114 = vld [vmem:[#allocation5 + $0x98] sm:$0xff]
    %v115 = vld [vmem:[#allocation5 + $0xa0] sm:$0xff]
    %v116 = vld [vmem:[#allocation5 + $0xa8] sm:$0xff]
    %v117 = vld [vmem:[#allocation5 + $0xb0] sm:$0xff]
    %v118 = vld [vmem:[#allocation5 + $0xb8] sm:$0xff]
    %v119 = vld [vmem:[#allocation5 + $0xc0] sm:$0xff]
    %v120 = vld [vmem:[#allocation5 + $0xc8] sm:$0xff]
    %v121 = vld [vmem:[#allocation5 + $0xd0] sm:$0xff]
    %v122 = vld [vmem:[#allocation5 + $0xd8] sm:$0xff]
    %v123 = vld [vmem:[#allocation5 + $0xe0] sm:$0xff]
    %v124 = vld [vmem:[#allocation5 + $0xe8] sm:$0xff]
    %v125 = vld [vmem:[#allocation5 + $0xf0] sm:$0xff]
    %v126 = vld [vmem:[#allocation5 + $0xf8] sm:$0xff]
    %v127 = vld [vmem:[#allocation5 + $0x100] sm:$0xff]
    %v128 = vld [vmem:[#allocation5 + $0x108] sm:$0xff]
    %v129 = vld [vmem:[#allocation5 + $0x110] sm:$0xff]
    %v130 = vld [vmem:[#allocation5 + $0x118] sm:$0xff]
    %v131 = vld [vmem:[#allocation5 + $0x120] sm:$0xff]
    %v132 = vld [vmem:[#allocation5 + $0x128] sm:$0xff]
    %v133 = vld [vmem:[#allocation5 + $0x130] sm:$0xff]
    %v134 = vld [vmem:[#allocation5 + $0x138] sm:$0xff]
    %v135 = vld [vmem:[#allocation5 + $0x140] sm:$0xff]
    %v136 = vld [vmem:[#allocation5 + $0x148] sm:$0xff]
    %v137 = vld [vmem:[#allocation5 + $0x150] sm:$0xff]
    %v138 = vld [vmem:[#allocation5 + $0x158] sm:$0xff]
    %v139 = vld [vmem:[#allocation5 + $0x160] sm:$0xff]
    %v140 = vld [vmem:[#allocation5 + $0x168] sm:$0xff]
    %v141 = vld [vmem:[#allocation5 + $0x170] sm:$0xff]
    %v142 = vld [vmem:[#allocation5 + $0x178] sm:$0xff]
    %v143 = vld [vmem:[#allocation5 + $0x180] sm:$0xff]
    %v144 = vld [vmem:[#allocation5 + $0x188] sm:$0xff]
    %v145 = vld [vmem:[#allocation5 + $0x190] sm:$0xff]
    %v146 = vld [vmem:[#allocation5 + $0x198] sm:$0xff]
    %v147 = vld [vmem:[#allocation5 + $0x1a0] sm:$0xff]
    %v148 = vld [vmem:[#allocation5 + $0x1a8] sm:$0xff]
    %v149 = vld [vmem:[#allocation5 + $0x1b0] sm:$0xff]
    %v150 = vld [vmem:[#allocation5 + $0x1b8] sm:$0xff]
    %v151 = vld [vmem:[#allocation5 + $0x1c0] sm:$0xff]
    %v152 = vld [vmem:[#allocation5 + $0x1c8] sm:$0xff]
    %v153 = vld [vmem:[#allocation5 + $0x1d0] sm:$0xff]
    %v154 = vld [vmem:[#allocation5 + $0x1d8] sm:$0xff]
    %v155 = vld [vmem:[#allocation5 + $0x1e0] sm:$0xff]
    %v156 = vld [vmem:[#allocation5 + $0x1e8] sm:$0xff]
    %v157 = vld [vmem:[#allocation5 + $0x1f0] sm:$0xff]
    %v158 = vld [vmem:[#allocation5 + $0x1f8] sm:$0xff]
    %v159 = vld [vmem:[%s2] sm:$0x3]
    %v161 = vlaneseq
    %v162 = vshrl.u32 %v161, 7
    %v163 = vsub.s32 0, %v162
    %v164 = vrot.slane %v159, %v163
    %v165 = vlaneseq
    %v166 = vshrl.u32 %v165, 7
    %v167 = vsub.s32 1, %v166
    %v168 = vrot.slane %v159, %v167
    %v235 = vunpack.c.l.b16 %v95
    %v236 = vunpack.c.h.b16 %v95
    %v237 = vunpack.c.l.b16 %v96
    %v238 = vunpack.c.h.b16 %v96
    %v239 = vunpack.c.l.b16 %v97
    %v240 = vunpack.c.h.b16 %v97
    %v241 = vunpack.c.l.b16 %v98
    %v242 = vunpack.c.h.b16 %v98
    %v243 = vunpack.c.l.b16 %v99
    %v244 = vunpack.c.h.b16 %v99
    %v245 = vunpack.c.l.b16 %v100
    %v246 = vunpack.c.h.b16 %v100
    %v247 = vunpack.c.l.b16 %v101
    %v248 = vunpack.c.h.b16 %v101
    %v249 = vunpack.c.l.b16 %v102
    %v250 = vunpack.c.h.b16 %v102
    %v251 = vunpack.c.l.b16 %v103
    %v252 = vunpack.c.h.b16 %v103
    %v253 = vunpack.c.l.b16 %v104
    %v254 = vunpack.c.h.b16 %v104
    %v255 = vunpack.c.l.b16 %v105
    %v256 = vunpack.c.h.b16 %v105
    %v257 = vunpack.c.l.b16 %v106
    %v258 = vunpack.c.h.b16 %v106
    %v259 = vunpack.c.l.b16 %v107
    %v260 = vunpack.c.h.b16 %v107
    %v261 = vunpack.c.l.b16 %v108
    %v262 = vunpack.c.h.b16 %v108
    %v263 = vunpack.c.l.b16 %v109
    %v264 = vunpack.c.h.b16 %v109
    %v265 = vunpack.c.l.b16 %v110
    %v266 = vunpack.c.h.b16 %v110
    %v267 = vunpack.c.l.b16 %v111
    %v268 = vunpack.c.h.b16 %v111
    %v269 = vunpack.c.l.b16 %v112
    %v270 = vunpack.c.h.b16 %v112
    %v271 = vunpack.c.l.b16 %v113
    %v272 = vunpack.c.h.b16 %v113
    %v273 = vunpack.c.l.b16 %v114
    %v274 = vunpack.c.h.b16 %v114
    %v275 = vunpack.c.l.b16 %v115
    %v276 = vunpack.c.h.b16 %v115
    %v277 = vunpack.c.l.b16 %v116
    %v278 = vunpack.c.h.b16 %v116
    %v279 = vunpack.c.l.b16 %v117
    %v280 = vunpack.c.h.b16 %v117
    %v281 = vunpack.c.l.b16 %v118
    %v282 = vunpack.c.h.b16 %v118
    %v283 = vunpack.c.l.b16 %v119
    %v284 = vunpack.c.h.b16 %v119
    %v285 = vunpack.c.l.b16 %v120
    %v286 = vunpack.c.h.b16 %v120
    %v287 = vunpack.c.l.b16 %v121
    %v288 = vunpack.c.h.b16 %v121
    %v289 = vunpack.c.l.b16 %v122
    %v290 = vunpack.c.h.b16 %v122
    %v291 = vunpack.c.l.b16 %v123
    %v292 = vunpack.c.h.b16 %v123
    %v293 = vunpack.c.l.b16 %v124
    %v294 = vunpack.c.h.b16 %v124
    %v295 = vunpack.c.l.b16 %v125
    %v296 = vunpack.c.h.b16 %v125
    %v297 = vunpack.c.l.b16 %v126
    %v298 = vunpack.c.h.b16 %v126
    %v299 = vunpack.c.l.b16 %v127
    %v300 = vunpack.c.h.b16 %v127
    %v301 = vunpack.c.l.b16 %v128
    %v302 = vunpack.c.h.b16 %v128
    %v303 = vunpack.c.l.b16 %v129
    %v304 = vunpack.c.h.b16 %v129
    %v305 = vunpack.c.l.b16 %v130
    %v306 = vunpack.c.h.b16 %v130
    %v307 = vunpack.c.l.b16 %v131
    %v308 = vunpack.c.h.b16 %v131
    %v309 = vunpack.c.l.b16 %v132
    %v310 = vunpack.c.h.b16 %v132
    %v311 = vunpack.c.l.b16 %v133
    %v312 = vunpack.c.h.b16 %v133
    %v313 = vunpack.c.l.b16 %v134
    %v314 = vunpack.c.h.b16 %v134
    %v315 = vunpack.c.l.b16 %v135
    %v316 = vunpack.c.h.b16 %v135
    %v317 = vunpack.c.l.b16 %v136
    %v318 = vunpack.c.h.b16 %v136
    %v319 = vunpack.c.l.b16 %v137
    %v320 = vunpack.c.h.b16 %v137
    %v321 = vunpack.c.l.b16 %v138
    %v322 = vunpack.c.h.b16 %v138
    %v323 = vunpack.c.l.b16 %v139
    %v324 = vunpack.c.h.b16 %v139
    %v325 = vunpack.c.l.b16 %v140
    %v326 = vunpack.c.h.b16 %v140
    %v327 = vunpack.c.l.b16 %v141
    %v328 = vunpack.c.h.b16 %v141
    %v329 = vunpack.c.l.b16 %v142
    %v330 = vunpack.c.h.b16 %v142
    %v331 = vunpack.c.l.b16 %v143
    %v332 = vunpack.c.h.b16 %v143
    %v333 = vunpack.c.l.b16 %v144
    %v334 = vunpack.c.h.b16 %v144
    %v335 = vunpack.c.l.b16 %v145
    %v336 = vunpack.c.h.b16 %v145
    %v337 = vunpack.c.l.b16 %v146
    %v338 = vunpack.c.h.b16 %v146
    %v339 = vunpack.c.l.b16 %v147
    %v340 = vunpack.c.h.b16 %v147
    %v341 = vunpack.c.l.b16 %v148
    %v342 = vunpack.c.h.b16 %v148
    %v343 = vunpack.c.l.b16 %v149
    %v344 = vunpack.c.h.b16 %v149
    %v345 = vunpack.c.l.b16 %v150
    %v346 = vunpack.c.h.b16 %v150
    %v347 = vunpack.c.l.b16 %v151
    %v348 = vunpack.c.h.b16 %v151
    %v349 = vunpack.c.l.b16 %v152
    %v350 = vunpack.c.h.b16 %v152
    %v351 = vunpack.c.l.b16 %v153
    %v352 = vunpack.c.h.b16 %v153
    %v353 = vunpack.c.l.b16 %v154
    %v354 = vunpack.c.h.b16 %v154
    %v355 = vunpack.c.l.b16 %v155
    %v356 = vunpack.c.h.b16 %v155
    %v357 = vunpack.c.l.b16 %v156
    %v358 = vunpack.c.h.b16 %v156
    %v359 = vunpack.c.l.b16 %v157
    %v360 = vunpack.c.h.b16 %v157
    %v361 = vunpack.c.l.b16 %v158
    %v362 = vunpack.c.h.b16 %v158
    %v363 = vpack.c.b16 %v237, %v235
    %v364 = vpack.c.b16 %v238, %v236
    %v365 = vpack.c.b16 %v241, %v239
    %v366 = vpack.c.b16 %v242, %v240
    %v367 = vpack.c.b16 %v245, %v243
    %v368 = vpack.c.b16 %v246, %v244
    %v369 = vpack.c.b16 %v249, %v247
    %v370 = vpack.c.b16 %v250, %v248
    %v371 = vpack.c.b16 %v253, %v251
    %v372 = vpack.c.b16 %v254, %v252
    %v373 = vpack.c.b16 %v257, %v255
    %v374 = vpack.c.b16 %v258, %v256
    %v375 = vpack.c.b16 %v261, %v259
    %v376 = vpack.c.b16 %v262, %v260
    %v377 = vpack.c.b16 %v265, %v263
    %v378 = vpack.c.b16 %v266, %v264
    %v379 = vpack.c.b16 %v269, %v267
    %v380 = vpack.c.b16 %v270, %v268
    %v381 = vpack.c.b16 %v273, %v271
    %v382 = vpack.c.b16 %v274, %v272
    %v383 = vpack.c.b16 %v277, %v275
    %v384 = vpack.c.b16 %v278, %v276
    %v385 = vpack.c.b16 %v281, %v279
    %v386 = vpack.c.b16 %v282, %v280
    %v387 = vpack.c.b16 %v285, %v283
    %v388 = vpack.c.b16 %v286, %v284
    %v389 = vpack.c.b16 %v289, %v287
    %v390 = vpack.c.b16 %v290, %v288
    %v391 = vpack.c.b16 %v293, %v291
    %v392 = vpack.c.b16 %v294, %v292
    %v393 = vpack.c.b16 %v297, %v295
    %v394 = vpack.c.b16 %v298, %v296
    %v395 = vpack.c.b16 %v301, %v299
    %v396 = vpack.c.b16 %v302, %v300
    %v397 = vpack.c.b16 %v305, %v303
    %v398 = vpack.c.b16 %v306, %v304
    %v399 = vpack.c.b16 %v309, %v307
    %v400 = vpack.c.b16 %v310, %v308
    %v401 = vpack.c.b16 %v313, %v311
    %v402 = vpack.c.b16 %v314, %v312
    %v403 = vpack.c.b16 %v317, %v315
    %v404 = vpack.c.b16 %v318, %v316
    %v405 = vpack.c.b16 %v321, %v319
    %v406 = vpack.c.b16 %v322, %v320
    %v407 = vpack.c.b16 %v325, %v323
    %v408 = vpack.c.b16 %v326, %v324
    %v409 = vpack.c.b16 %v329, %v327
    %v410 = vpack.c.b16 %v330, %v328
    %v411 = vpack.c.b16 %v333, %v331
    %v412 = vpack.c.b16 %v334, %v332
    %v413 = vpack.c.b16 %v337, %v335
    %v414 = vpack.c.b16 %v338, %v336
    %v415 = vpack.c.b16 %v341, %v339
    %v416 = vpack.c.b16 %v342, %v340
    %v417 = vpack.c.b16 %v345, %v343
    %v418 = vpack.c.b16 %v346, %v344
    %v419 = vpack.c.b16 %v349, %v347
    %v420 = vpack.c.b16 %v350, %v348
    %v421 = vpack.c.b16 %v353, %v351
    %v422 = vpack.c.b16 %v354, %v352
    %v423 = vpack.c.b16 %v357, %v355
    %v424 = vpack.c.b16 %v358, %v356
    %v425 = vpack.c.b16 %v361, %v359
    %v426 = vpack.c.b16 %v362, %v360
    %491 = vmatprep.subr.bf16.mxu0 %v364
    %492 = vmatpush1.bf16.msra.mxu0 %v363
    %493 = vmatprep.subr.bf16.mxu0 %v366
    %494 = vmatpush1.bf16.msra.mxu0 %v365
    %495 = vmatprep.subr.bf16.mxu0 %v368
    %496 = vmatpush1.bf16.msra.mxu0 %v367
    %497 = vmatprep.subr.bf16.mxu0 %v370
    %498 = vmatpush1.bf16.msra.mxu0 %v369
    %499 = vmatprep.subr.bf16.mxu0 %v372
    %500 = vmatpush1.bf16.msra.mxu0 %v371
    %501 = vmatprep.subr.bf16.mxu0 %v374
    %502 = vmatpush1.bf16.msra.mxu0 %v373
    %503 = vmatprep.subr.bf16.mxu0 %v376
    %504 = vmatpush1.bf16.msra.mxu0 %v375
    %505 = vmatprep.subr.bf16.mxu0 %v378
    %506 = vmatpush1.bf16.msra.mxu0 %v377
    %507 = vmatprep.subr.bf16.mxu0 %v380
    %508 = vmatpush1.bf16.msra.mxu0 %v379
    %509 = vmatprep.subr.bf16.mxu0 %v382
    %510 = vmatpush1.bf16.msra.mxu0 %v381
    %511 = vmatprep.subr.bf16.mxu0 %v384
    %512 = vmatpush1.bf16.msra.mxu0 %v383
    %513 = vmatprep.subr.bf16.mxu0 %v386
    %514 = vmatpush1.bf16.msra.mxu0 %v385
    %515 = vmatprep.subr.bf16.mxu0 %v388
    %516 = vmatpush1.bf16.msra.mxu0 %v387
    %517 = vmatprep.subr.bf16.mxu0 %v390
    %518 = vmatpush1.bf16.msra.mxu0 %v389
    %519 = vmatprep.subr.bf16.mxu0 %v392
    %520 = vmatpush1.bf16.msra.mxu0 %v391
    %521 = vmatprep.subr.bf16.mxu0 %v394
    %522 = vmatpush1.bf16.msra.mxu0 %v393
    %523 = vmatprep.mubr.bf16.mxu0 %v92
    %524 = vmatmul.mubr.bf16.gmra.mrb[0].mxu0 %v91
    %v525 = vpop.f32.mrb[0].mxu0
    %v526 = vadd.f32 %v164, %v525
    %v527 = vpop.f32.mrb[0].mxu0
    %v528 = vadd.f32 %v168, %v527
    %v529 = vpop.f32.mrb[0].mxu0
    %v530 = vadd.f32 %v164, %v529
    %v531 = vpop.f32.mrb[0].mxu0
    %v532 = vadd.f32 %v168, %v531
    %533 = vdwg.mxu0
    %534 = vmatprep.subr.bf16.mxu0 %v396
    %535 = vmatpush1.bf16.msra.mxu0 %v395
    %536 = vmatprep.subr.bf16.mxu0 %v398
    %537 = vmatpush1.bf16.msra.mxu0 %v397
    %538 = vmatprep.subr.bf16.mxu0 %v400
    %539 = vmatpush1.bf16.msra.mxu0 %v399
    %540 = vmatprep.subr.bf16.mxu0 %v402
    %541 = vmatpush1.bf16.msra.mxu0 %v401
    %542 = vmatprep.subr.bf16.mxu0 %v404
    %543 = vmatpush1.bf16.msra.mxu0 %v403
    %544 = vmatprep.subr.bf16.mxu0 %v406
    %545 = vmatpush1.bf16.msra.mxu0 %v405
    %546 = vmatprep.subr.bf16.mxu0 %v408
    %547 = vmatpush1.bf16.msra.mxu0 %v407
    %548 = vmatprep.subr.bf16.mxu0 %v410
    %549 = vmatpush1.bf16.msra.mxu0 %v409
    %550 = vmatprep.subr.bf16.mxu0 %v412
    %551 = vmatpush1.bf16.msra.mxu0 %v411
    %552 = vmatprep.subr.bf16.mxu0 %v414
    %553 = vmatpush1.bf16.msra.mxu0 %v413
    %554 = vmatprep.subr.bf16.mxu0 %v416
    %555 = vmatpush1.bf16.msra.mxu0 %v415
    %556 = vmatprep.subr.bf16.mxu0 %v418
    %557 = vmatpush1.bf16.msra.mxu0 %v417
    %558 = vmatprep.subr.bf16.mxu0 %v420
    %559 = vmatpush1.bf16.msra.mxu0 %v419
    %560 = vmatprep.subr.bf16.mxu0 %v422
    %561 = vmatpush1.bf16.msra.mxu0 %v421
    %562 = vmatprep.subr.bf16.mxu0 %v424
    %563 = vmatpush1.bf16.msra.mxu0 %v423
    %564 = vmatprep.subr.bf16.mxu0 %v426
    %565 = vmatpush1.bf16.msra.mxu0 %v425
    %566 = vmatprep.mubr.bf16.mxu0 %v94
    %567 = vmatmul.mubr.bf16.gmra.mrb[0].mxu0 %v93
    %v568 = vpop.f32.mrb[0].mxu0
    %v569 = vadd.f32 %v526, %v568
    %v570 = vpop.f32.mrb[0].mxu0
    %v571 = vadd.f32 %v528, %v570
    %v572 = vpop.f32.mrb[0].mxu0
    %v573 = vadd.f32 %v530, %v572
    %v574 = vpop.f32.mrb[0].mxu0
    %v575 = vadd.f32 %v532, %v574
    %576 = vdwg.mxu0
    %v577 = vmax.f32 %v569, 0.0
    %v578 = vmax.f32 %v571, 0.0
    %v579 = vmax.f32 %v573, 0.0
    %v580 = vmax.f32 %v575, 0.0
    %v581 = vpack.c.bf16 %v579, %v577
    %v582 = vpack.c.bf16 %v580, %v578
    %v583 = vld [vmem:[#allocation7] sm:$0xf]
    %v584 = vld [vmem:[#allocation7 + $0x4] sm:$0xf]
    %v585 = vld [vmem:[#allocation7 + $0x8] sm:$0xf]
    %v586 = vld [vmem:[#allocation7 + $0xc] sm:$0xf]
    %v587 = vld [vmem:[#allocation7 + $0x10] sm:$0xf]
    %v588 = vld [vmem:[#allocation7 + $0x14] sm:$0xf]
    %v589 = vld [vmem:[#allocation7 + $0x18] sm:$0xf]
    %v590 = vld [vmem:[#allocation7 + $0x1c] sm:$0xf]
    %v591 = vld [vmem:[#allocation7 + $0x20] sm:$0xf]
    %v592 = vld [vmem:[#allocation7 + $0x24] sm:$0xf]
    %v593 = vld [vmem:[#allocation7 + $0x28] sm:$0xf]
    %v594 = vld [vmem:[#allocation7 + $0x2c] sm:$0xf]
    %v595 = vld [vmem:[#allocation7 + $0x30] sm:$0xf]
    %v596 = vld [vmem:[#allocation7 + $0x34] sm:$0xf]
    %v597 = vld [vmem:[#allocation7 + $0x38] sm:$0xf]
    %v598 = vld [vmem:[#allocation7 + $0x3c] sm:$0xf]
    %v599 = vld [vmem:[#allocation7 + $0x40] sm:$0xf]
    %v600 = vld [vmem:[#allocation7 + $0x44] sm:$0xf]
    %v601 = vld [vmem:[#allocation7 + $0x48] sm:$0xf]
    %v602 = vld [vmem:[#allocation7 + $0x4c] sm:$0xf]
    %v603 = vld [vmem:[#allocation7 + $0x50] sm:$0xf]
    %v604 = vld [vmem:[#allocation7 + $0x54] sm:$0xf]
    %v605 = vld [vmem:[#allocation7 + $0x58] sm:$0xf]
    %v606 = vld [vmem:[#allocation7 + $0x5c] sm:$0xf]
    %v607 = vld [vmem:[#allocation7 + $0x60] sm:$0xf]
    %v608 = vld [vmem:[#allocation7 + $0x64] sm:$0xf]
    %v609 = vld [vmem:[#allocation7 + $0x68] sm:$0xf]
    %v610 = vld [vmem:[#allocation7 + $0x6c] sm:$0xf]
    %v611 = vld [vmem:[#allocation7 + $0x70] sm:$0xf]
    %v612 = vld [vmem:[#allocation7 + $0x74] sm:$0xf]
    %v613 = vld [vmem:[#allocation7 + $0x78] sm:$0xf]
    %v614 = vld [vmem:[#allocation7 + $0x7c] sm:$0xf]
    %v615 = vld [vmem:[%s4] sm:$0x1]
    %v617 = vlaneseq
    %v618 = vshrl.u32 %v617, 7
    %v619 = vsub.s32 0, %v618
    %v620 = vrot.slane %v615, %v619
    %v654 = vunpack.c.l.b16 %v583
    %v655 = vunpack.c.l.b16 %v584
    %v656 = vunpack.c.l.b16 %v585
    %v657 = vunpack.c.l.b16 %v586
    %v658 = vunpack.c.l.b16 %v587
    %v659 = vunpack.c.l.b16 %v588
    %v660 = vunpack.c.l.b16 %v589
    %v661 = vunpack.c.l.b16 %v590
    %v662 = vunpack.c.l.b16 %v591
    %v663 = vunpack.c.l.b16 %v592
    %v664 = vunpack.c.l.b16 %v593
    %v665 = vunpack.c.l.b16 %v594
    %v666 = vunpack.c.l.b16 %v595
    %v667 = vunpack.c.l.b16 %v596
    %v668 = vunpack.c.l.b16 %v597
    %v669 = vunpack.c.l.b16 %v598
    %v670 = vunpack.c.l.b16 %v599
    %v671 = vunpack.c.l.b16 %v600
    %v672 = vunpack.c.l.b16 %v601
    %v673 = vunpack.c.l.b16 %v602
    %v674 = vunpack.c.l.b16 %v603
    %v675 = vunpack.c.l.b16 %v604
    %v676 = vunpack.c.l.b16 %v605
    %v677 = vunpack.c.l.b16 %v606
    %v678 = vunpack.c.l.b16 %v607
    %v679 = vunpack.c.l.b16 %v608
    %v680 = vunpack.c.l.b16 %v609
    %v681 = vunpack.c.l.b16 %v610
    %v682 = vunpack.c.l.b16 %v611
    %v683 = vunpack.c.l.b16 %v612
    %v684 = vunpack.c.l.b16 %v613
    %v685 = vunpack.c.l.b16 %v614
    %v686 = vpack.c.b16 %v655, %v654
    %v687 = vpack.c.b16 %v657, %v656
    %v688 = vpack.c.b16 %v659, %v658
    %v689 = vpack.c.b16 %v661, %v660
    %v690 = vpack.c.b16 %v663, %v662
    %v691 = vpack.c.b16 %v665, %v664
    %v692 = vpack.c.b16 %v667, %v666
    %v693 = vpack.c.b16 %v669, %v668
    %v694 = vpack.c.b16 %v671, %v670
    %v695 = vpack.c.b16 %v673, %v672
    %v696 = vpack.c.b16 %v675, %v674
    %v697 = vpack.c.b16 %v677, %v676
    %v698 = vpack.c.b16 %v679, %v678
    %v699 = vpack.c.b16 %v681, %v680
    %v700 = vpack.c.b16 %v683, %v682
    %v701 = vpack.c.b16 %v685, %v684
    %718 = vmatprep.subr.bf16.mxu0 0
    %719 = vmatpush1.bf16.msra.mxu0 %v686
    %720 = vmatprep.subr.bf16.mxu0 0
    %721 = vmatpush1.bf16.msra.mxu0 %v687
    %722 = vmatprep.subr.bf16.mxu0 0
    %723 = vmatpush1.bf16.msra.mxu0 %v688
    %724 = vmatprep.subr.bf16.mxu0 0
    %725 = vmatpush1.bf16.msra.mxu0 %v689
    %726 = vmatprep.subr.bf16.mxu0 0
    %727 = vmatpush1.bf16.msra.mxu0 %v690
    %728 = vmatprep.subr.bf16.mxu0 0
    %729 = vmatpush1.bf16.msra.mxu0 %v691
    %730 = vmatprep.subr.bf16.mxu0 0
    %731 = vmatpush1.bf16.msra.mxu0 %v692
    %732 = vmatprep.subr.bf16.mxu0 0
    %733 = vmatpush1.bf16.msra.mxu0 %v693
    %734 = vmatprep.subr.bf16.mxu0 0
    %735 = vmatpush1.bf16.msra.mxu0 %v694
    %736 = vmatprep.subr.bf16.mxu0 0
    %737 = vmatpush1.bf16.msra.mxu0 %v695
    %738 = vmatprep.subr.bf16.mxu0 0
    %739 = vmatpush1.bf16.msra.mxu0 %v696
    %740 = vmatprep.subr.bf16.mxu0 0
    %741 = vmatpush1.bf16.msra.mxu0 %v697
    %742 = vmatprep.subr.bf16.mxu0 0
    %743 = vmatpush1.bf16.msra.mxu0 %v698
    %744 = vmatprep.subr.bf16.mxu0 0
    %745 = vmatpush1.bf16.msra.mxu0 %v699
    %746 = vmatprep.subr.bf16.mxu0 0
    %747 = vmatpush1.bf16.msra.mxu0 %v700
    %748 = vmatprep.subr.bf16.mxu0 0
    %749 = vmatpush1.bf16.msra.mxu0 %v701
    %750 = vmatprep.mubr.bf16.mxu0 %v582
    %751 = vmatmul.mubr.bf16.gmra.mrb[0].mxu0 %v581
    %v752 = vpop.f32.mrb[0].mxu0
    %v753 = vadd.f32 %v620, %v752
    %v754 = vpop.f32.mrb[0].mxu0
    %v755 = vpop.f32.mrb[0].mxu0
    %v756 = vadd.f32 %v620, %v755
    %v757 = vpop.f32.mrb[0].mxu0
    %758 = vdwg.mxu0
    %v759 = vmax.f32 %v753, 0.0
    %v760 = vmax.f32 %v756, 0.0
    %v761 = vpack.c.bf16 %v760, %v759
    %v762 = vld [vmem:[#allocation8] sm:$0xf]
    %v763 = vld [vmem:[#allocation8 + $0x4] sm:$0xf]
    %v764 = vld [vmem:[#allocation8 + $0x8] sm:$0xf]
    %v765 = vld [vmem:[#allocation8 + $0xc] sm:$0xf]
    %v766 = vld [vmem:[#allocation8 + $0x10] sm:$0xf]
    %v767 = vld [vmem:[#allocation8 + $0x14] sm:$0xf]
    %v768 = vld [vmem:[#allocation8 + $0x18] sm:$0xf]
    %v769 = vld [vmem:[#allocation8 + $0x1c] sm:$0xf]
    %v770 = vld [vmem:[#allocation8 + $0x20] sm:$0xf]
    %v771 = vld [vmem:[#allocation8 + $0x24] sm:$0xf]
    %v772 = vld [vmem:[#allocation8 + $0x28] sm:$0xf]
    %v773 = vld [vmem:[#allocation8 + $0x2c] sm:$0xf]
    %v774 = vld [vmem:[#allocation8 + $0x30] sm:$0xf]
    %v775 = vld [vmem:[#allocation8 + $0x34] sm:$0xf]
    %v776 = vld [vmem:[#allocation8 + $0x38] sm:$0xf]
    %v777 = vld [vmem:[#allocation8 + $0x3c] sm:$0xf]
    %v778 = vld [vmem:[%s6] sm:$0x1]
    %v780 = vlaneseq
    %v781 = vshrl.u32 %v780, 7
    %v782 = vsub.s32 0, %v781
    %v783 = vrot.slane %v778, %v782
    %v801 = vunpack.c.l.b16 %v762
    %v802 = vunpack.c.l.b16 %v763
    %v803 = vunpack.c.l.b16 %v764
    %v804 = vunpack.c.l.b16 %v765
    %v805 = vunpack.c.l.b16 %v766
    %v806 = vunpack.c.l.b16 %v767
    %v807 = vunpack.c.l.b16 %v768
    %v808 = vunpack.c.l.b16 %v769
    %v809 = vunpack.c.l.b16 %v770
    %v810 = vunpack.c.l.b16 %v771
    %v811 = vunpack.c.l.b16 %v772
    %v812 = vunpack.c.l.b16 %v773
    %v813 = vunpack.c.l.b16 %v774
    %v814 = vunpack.c.l.b16 %v775
    %v815 = vunpack.c.l.b16 %v776
    %v816 = vunpack.c.l.b16 %v777
    %v817 = vpack.c.b16 %v802, %v801
    %v818 = vpack.c.b16 %v804, %v803
    %v819 = vpack.c.b16 %v806, %v805
    %v820 = vpack.c.b16 %v808, %v807
    %v821 = vpack.c.b16 %v810, %v809
    %v822 = vpack.c.b16 %v812, %v811
    %v823 = vpack.c.b16 %v814, %v813
    %v824 = vpack.c.b16 %v816, %v815
    %833 = vmatprep.subr.bf16.mxu0 0
    %834 = vmatpush1.bf16.msra.mxu0 %v817
    %835 = vmatprep.subr.bf16.mxu0 0
    %836 = vmatpush1.bf16.msra.mxu0 %v818
    %837 = vmatprep.subr.bf16.mxu0 0
    %838 = vmatpush1.bf16.msra.mxu0 %v819
    %839 = vmatprep.subr.bf16.mxu0 0
    %840 = vmatpush1.bf16.msra.mxu0 %v820
    %841 = vmatprep.subr.bf16.mxu0 0
    %842 = vmatpush1.bf16.msra.mxu0 %v821
    %843 = vmatprep.subr.bf16.mxu0 0
    %844 = vmatpush1.bf16.msra.mxu0 %v822
    %845 = vmatprep.subr.bf16.mxu0 0
    %846 = vmatpush1.bf16.msra.mxu0 %v823
    %847 = vmatprep.subr.bf16.mxu0 0
    %848 = vmatpush1.bf16.msra.mxu0 %v824
    %849 = vmatprep.subr.bf16.mxu0 0
    %850 = vmatpush1.bf16.msra.mxu0 0
    %851 = vmatprep.subr.bf16.mxu0 0
    %852 = vmatpush1.bf16.msra.mxu0 0
    %853 = vmatprep.subr.bf16.mxu0 0
    %854 = vmatpush1.bf16.msra.mxu0 0
    %855 = vmatprep.subr.bf16.mxu0 0
    %856 = vmatpush1.bf16.msra.mxu0 0
    %857 = vmatprep.subr.bf16.mxu0 0
    %858 = vmatpush1.bf16.msra.mxu0 0
    %859 = vmatprep.subr.bf16.mxu0 0
    %860 = vmatpush1.bf16.msra.mxu0 0
    %861 = vmatprep.subr.bf16.mxu0 0
    %862 = vmatpush1.bf16.msra.mxu0 0
    %863 = vmatprep.subr.bf16.mxu0 0
    %864 = vmatpush1.bf16.msra.mxu0 0
    %865 = vmatprep.mubr.bf16.mxu0 0
    %866 = vmatmul.mubr.bf16.gmra.mrb[0].mxu0 %v761
    %v867 = vpop.f32.mrb[0].mxu0
    %v868 = vadd.f32 %v783, %v867
    %v869 = vpop.f32.mrb[0].mxu0
    %v870 = vpop.f32.mrb[0].mxu0
    %v871 = vadd.f32 %v783, %v870
    %v872 = vpop.f32.mrb[0].mxu0
    %873 = vdwg.mxu0
    %v874 = vpack.c.bf16 %v871, %v868
    %v876 = vunpack.c.l.b16 %v874
    %v877 = vunpack.c.h.b16 %v874
    %v878 = vpack.c.b16 %v876, %v876
    %v879 = vpack.c.b16 %v877, %v877
    %882 = vst [vmem:[#allocation10] sm:$0xf] %v878
    %883 = vst [vmem:[#allocation10 + $0x4] sm:$0xf] %v879
    // Predicated region
    $region46: #{tpu_custom_call.1} parent=1 // pred_check
      _
    $region47: #{tpu_custom_call.1} parent=1 // pred_check_branch
      %885 = sbr.rel (0) target = $region49
    $region48: #{tpu_custom_call.1} parent=1 // pred_region
      %s887 = ssub.s32 128, 64
      %888 = vsyncadd [#allocation4], %s887
      %s889 = sshll.u32 [#allocation10], 4
      %s890 = int_to_ptr.vmem [resolvable:$true] %s889
      %895 = dma.vmem_to_hbm [thread:$0]  %s890, 64, %s7, [#allocation4], 64, 64, 4
    $region49: #{tpu_custom_call.1} parent=1 // pred_fallthru
      _
    // Predicated region
    $region50: #{tpu_custom_call.1} parent=1 // pred_check
      _
    $region51: #{tpu_custom_call.1} parent=1 // pred_check_branch
      %897 = sbr.rel (0) target = $region53
    $region52: #{tpu_custom_call.1} parent=1 // pred_region
      %898 = dma.done [#allocation4], 128
    $region53: #{tpu_custom_call.1} parent=1 // pred_fallthru
      _
    %899 = vsyncpa [#allocation3], 1
    %900 = vsyncpa [#allocation6], 1
    %901 = vsyncpa [#allocation9], 1
    %902 = vsyncpa [#allocation4], 1

</llo_original>
